<compile_context>
chip_gen: v7x
topology: tpu7x:2x2x1
jax: 0.10.0
libtpu: 0.0.40
codegen_flags: <defaults>
</compile_context>

<pallas_src>
import functools

import jax
import jax.numpy as jnp
import numpy as np
from jax import lax
from jax.experimental import pallas as pl
from jax.experimental.pallas import tpu as pltpu


# --------------------------------------------------------------------------
# In-kernel helpers
# --------------------------------------------------------------------------
def _batch_loop(B, body, init):
    """Loop over the (static) batch dim.  Small B -> trace-time unroll (gives
    the LLO scheduler full visibility); large B -> rolled lax.fori_loop to
    bound code size."""
    if B <= 8:
        carry = init
        for b in range(B):
            carry = body(b, carry)
        return carry
    return lax.fori_loop(0, B, body, init)


def _lane_tree_sum(a):
    """Sum a (rows, L) f32 array over the lane axis.  When L is a multiple of
    128, the 128-lane groups are first tree-added on the VPU so only a single
    128-lane slab goes through the scarce XLU cross-lane reduce."""
    L = a.shape[-1]
    if L % 128 == 0 and L > 128:
        acc = a[:, 0:128]
        for j in range(1, L // 128):
            acc = acc + a[:, j * 128:(j + 1) * 128]
        a = acc
    return jnp.sum(a, axis=-1, keepdims=True)


# --------------------------------------------------------------------------
# Kernel
# --------------------------------------------------------------------------
def _vbn_kernel(x_ref, *refs, eps, new_coeff, old_coeff, has_ref, fma_dtype):
    if has_ref:
        (refm_ref, refms_ref, gamma_ref, beta_ref,
         out_ref, mean_ref, meansq_ref) = refs
    else:
        gamma_ref, beta_ref, out_ref, mean_ref, meansq_ref = refs

    B, ct, L = x_ref.shape

    # ---- Stats phase: sum over B first (VPU adds), then one lane reduce. ----
    def acc_body(b, carry):
        s, ssq = carry
        xb = x_ref[b].astype(jnp.float32)            # (ct, L)
        return s + xb, ssq + xb * xb

    zeros = jnp.zeros((ct, L), jnp.float32)
    s, ssq = _batch_loop(B, acc_body, (zeros, zeros))

    inv_n = 1.0 / float(B * L)
    mean = _lane_tree_sum(s) * inv_n                 # (ct, 1)
    mean_sq = _lane_tree_sum(ssq) * inv_n            # (ct, 1)

    if has_ref:
        mean = new_coeff * mean + old_coeff * refm_ref[...]
        mean_sq = new_coeff * mean_sq + old_coeff * refms_ref[...]

    # rsqrt on the EUP (own VLIW slot) instead of sqrt + VPU divide.
    inv_std = lax.rsqrt(eps + mean_sq - mean * mean)  # (ct, 1)

    # Fold normalization + affine into a single per-element FMA.
    scale = gamma_ref[...] * inv_std                 # (ct, 1)
    shift = beta_ref[...] - mean * scale             # (ct, 1)

    mean_ref[...] = mean.astype(mean_ref.dtype)
    meansq_ref[...] = mean_sq.astype(meansq_ref.dtype)

    # ---- Normalize phase: re-read x row by row (VMEM-resident, vld only). ---
    scale_c = scale.astype(fma_dtype)
    shift_c = shift.astype(fma_dtype)

    def norm_body(b, carry):
        xb = x_ref[b].astype(fma_dtype)              # (ct, L)
        out_ref[b] = (xb * scale_c + shift_c).astype(out_ref.dtype)
        return carry

    _batch_loop(B, norm_body, 0)


# --------------------------------------------------------------------------
# Generation-aware tiling
# --------------------------------------------------------------------------
def _vmem_capacity_bytes():
    try:
        info = pltpu.get_tpu_info()
        cap = int(getattr(info, "vmem_capacity_bytes", 0))
        if cap > 0:
            return cap
    except Exception:
        pass
    return 64 << 20  # conservative fallback: v7x per-TensorCore VMEM


def _choose_c_tile(B, C, L, itemsize, budget_bytes, min_steps=4):
    """Largest channel tile that (a) divides C, (b) is a multiple of 8
    (sublane granularity; params/stats use (c_tile, 1) blocks so the channel
    dim has no 128-lane constraint), and (c) keeps the full per-step working
    set inside budget_bytes -- preferring tiles that leave >= min_steps grid
    steps for pipelining and v7x two-core sharding."""
    # Per-channel bytes of one grid step:
    #   2x double-buffered input + 2x double-buffered output
    #   + f32 sum / sum-of-squares accumulators + one f32 (ct, L) temp
    #   + small per-channel param/stat buffers.
    per_c = 4 * B * L * itemsize + 3 * L * 4 + 64
    if C % 8 != 0:
        # Channel dim cannot be tiled at sublane granularity; single block.
        # TODO(synk): for C % 8 != 0 with huge B*L, also tile L along an
        # "arbitrary" reduction axis with VMEM stat scratch.
        return C
    divisors = [ct for ct in range(8, C + 1, 8) if C % ct == 0]
    fitting = [ct for ct in divisors if ct * per_c <= budget_bytes]
    if not fitting:
        return divisors[0]  # smallest legal tile; best effort
    for want_steps in (min_steps, 2, 1):
        cand = [ct for ct in fitting if C // ct >= want_steps]
        if cand:
            return max(cand)
    return max(fitting)


def _fma_dtype(x_dtype):
    """bf16 FMA for the bulk per-element work on v6e/v7x (native bf16 VPU);
    f32 everywhere else (v5e and older have no bf16 VALU)."""
    if jnp.dtype(x_dtype) != jnp.dtype(jnp.bfloat16):
        return jnp.float32
    kind = ""
    try:
        kind = jax.devices()[0].device_kind.lower()
    except Exception:
        pass
    if any(t in kind for t in ("v2", "v3", "v4", "v5")):
        return jnp.float32
    return jnp.bfloat16


# --------------------------------------------------------------------------
# Wrapper
# --------------------------------------------------------------------------
def virtual_batch_norm_1d(x, gamma, beta, ref_mean=None, ref_mean_sq=None,
                          eps=1e-5):
    """Pallas implementation of VirtualBatchNorm1d.forward.

    x:      (B, C, L)
    gamma:  (1, C, 1)
    beta:   (1, C, 1)
    ref_mean, ref_mean_sq: (1, C, 1) or None
    Returns (out (B,C,L) in x.dtype, mean (1,C,1) f32, mean_sq (1,C,1) f32).
    """
    B, C, L = x.shape
    itemsize = jnp.dtype(x.dtype).itemsize

    cap = _vmem_capacity_bytes()
    # Tile-sizing budget: generous on v5e/v6e (128 MiB physical) but capped at
    # 48 MiB so a chosen tile can never overflow v7x's 64 MiB-per-TC VMEM.
    budget = min(int(cap * 0.45), 48 << 20)
    # Explicitly raise the scoped VMEM limit (v5e default is only 16 MiB).
    vmem_limit = int(min(cap, max(2 * budget, 32 << 20)))

    c_tile = _choose_c_tile(B, C, L, itemsize, budget)
    grid = (C // c_tile,)

    # TODO(synk): if L % 128 != 0, a wrapper-side pad of L (or folding channels
    # into the lane dim) would turn masked vst.msk stores into full-width vst;
    # skipped here because the pad itself costs an extra HBM pass over x.

    gamma2d = gamma.reshape(C, 1).astype(jnp.float32)
    beta2d = beta.reshape(C, 1).astype(jnp.float32)

    x_spec = pl.BlockSpec((B, c_tile, L), lambda c: (0, c, 0))
    p_spec = pl.BlockSpec((c_tile, 1), lambda c: (c, 0))

    out_shape = (
        jax.ShapeDtypeStruct((B, C, L), x.dtype),
        jax.ShapeDtypeStruct((C, 1), jnp.float32),
        jax.ShapeDtypeStruct((C, 1), jnp.float32),
    )
    cost = pl.CostEstimate(
        flops=int(6 * B * C * L),
        transcendentals=int(C),
        bytes_accessed=int(2 * B * C * L * itemsize + 6 * C * 4),
    )
    cparams = pltpu.CompilerParams(
        dimension_semantics=("parallel",),
        vmem_limit_bytes=vmem_limit,
    )

    has_ref = (ref_mean is not None) and (ref_mean_sq is not None)
    new_coeff = 1.0 / (B + 1.0) if has_ref else 1.0
    old_coeff = 1.0 - new_coeff if has_ref else 0.0

    kernel = functools.partial(
        _vbn_kernel,
        eps=float(eps),
        new_coeff=float(new_coeff),
        old_coeff=float(old_coeff),
        has_ref=has_ref,
        fma_dtype=_fma_dtype(x.dtype),
    )

    if has_ref:
        refm2d = ref_mean.reshape(C, 1).astype(jnp.float32)
        refms2d = ref_mean_sq.reshape(C, 1).astype(jnp.float32)
        in_specs = [x_spec, p_spec, p_spec, p_spec, p_spec]
        args = (x, refm2d, refms2d, gamma2d, beta2d)
    else:
        in_specs = [x_spec, p_spec, p_spec]
        args = (x, gamma2d, beta2d)

    out, mean2d, meansq2d = pl.pallas_call(
        kernel,
        grid=grid,
        out_shape=out_shape,
        in_specs=in_specs,
        out_specs=(x_spec, p_spec, p_spec),
        compiler_params=cparams,
        cost_estimate=cost,
    )(*args)

    return out, mean2d.reshape(1, C, 1), meansq2d.reshape(1, C, 1)


# --------------------------------------------------------------------------
# Pure-JAX reference (matches the PyTorch module exactly)
# --------------------------------------------------------------------------
def _reference(x, gamma, beta, ref_mean, ref_mean_sq, eps=1e-5):
    mean = jnp.mean(jnp.mean(x, axis=2, keepdims=True), axis=0, keepdims=True)
    mean_sq = jnp.mean(jnp.mean(x * x, axis=2, keepdims=True), axis=0,
                       keepdims=True)
    if ref_mean is not None and ref_mean_sq is not None:
        B = x.shape[0]
        new_c = 1.0 / (B + 1.0)
        old_c = 1.0 - new_c
        mean = new_c * mean + old_c * ref_mean
        mean_sq = new_c * mean_sq + old_c * ref_mean_sq
    std = jnp.sqrt(eps + mean_sq - mean ** 2)
    out = (x - mean) / std * gamma + beta
    return out, mean, mean_sq


if __name__ == "__main__":
    key = jax.random.PRNGKey(0)
    B, C, L = 2, 4, 16  # batch, num_features, sequence length

    kx, kxref, kg = jax.random.split(key, 3)
    x_ref_batch = jax.random.normal(kxref, (B, C, L), jnp.float32)
    x = jax.random.normal(kx, (B, C, L), jnp.float32)

    # Parameters (deterministic init matching the module's __init__)
    gamma = 1.0 + 0.02 * jax.random.normal(kg, (1, C, 1), jnp.float32)
    beta = jnp.zeros((1, C, 1), jnp.float32)

    # Pass 1: reference batch (ref stats = None) -> produces ref_mean / ref_mean_sq
    out0, ref_mean, ref_mean_sq = virtual_batch_norm_1d(
        x_ref_batch, gamma, beta, None, None)
    jax.block_until_ready(out0)

    # Pass 2: real batch, blended with reference statistics
    out1, mean1, mean_sq1 = virtual_batch_norm_1d(
        x, gamma, beta, ref_mean, ref_mean_sq)
    jax.block_until_ready(out1)

    # Correctness check against pure-JAX reference of the PyTorch semantics
    r_out0, r_m0, r_ms0 = _reference(x_ref_batch, gamma, beta, None, None)
    r_out1, r_m1, r_ms1 = _reference(x, gamma, beta, r_m0, r_ms0)

    np.testing.assert_allclose(np.asarray(out0), np.asarray(r_out0),
                               rtol=1e-5, atol=1e-5)
    np.testing.assert_allclose(np.asarray(ref_mean), np.asarray(r_m0),
                               rtol=1e-5, atol=1e-5)
    np.testing.assert_allclose(np.asarray(ref_mean_sq), np.asarray(r_ms0),
                               rtol=1e-5, atol=1e-5)
    np.testing.assert_allclose(np.asarray(out1), np.asarray(r_out1),
                               rtol=1e-5, atol=1e-5)
    np.testing.assert_allclose(np.asarray(mean1), np.asarray(r_m1),
                               rtol=1e-5, atol=1e-5)
    np.testing.assert_allclose(np.asarray(mean_sq1), np.asarray(r_ms1),
                               rtol=1e-5, atol=1e-5)

    print("KERNEL_OK")
</pallas_src>

<mosaic_0001>
module attributes {stable_mosaic.version = 11 : i64} {
  func.func @_vbn_kernel(%arg0: i32, %arg1: memref<2x4x16xf32, #tpu.memory_space<vmem>>, %arg2: memref<4x1xf32, #tpu.memory_space<vmem>>, %arg3: memref<4x1xf32, #tpu.memory_space<vmem>>, %arg4: memref<2x4x16xf32, #tpu.memory_space<vmem>>, %arg5: memref<4x1xf32, #tpu.memory_space<vmem>>, %arg6: memref<4x1xf32, #tpu.memory_space<vmem>>) attributes {dimension_semantics = [#tpu.dimension_semantics<parallel>], iteration_bounds = array<i64: 1>, scalar_prefetch = 0 : i64, scratch_operands = 0 : i64, tpu.core_type = #tpu.core_type<tc>, window_params = [{transform_indices = @transform_0, window_bounds = array<i64: 2, 4, 16>}, {transform_indices = @transform_1, window_bounds = array<i64: 4, 1>}, {transform_indices = @transform_2, window_bounds = array<i64: 4, 1>}, {transform_indices = @transform_3, window_bounds = array<i64: 2, 4, 16>}, {transform_indices = @transform_4, window_bounds = array<i64: 4, 1>}, {transform_indices = @transform_5, window_bounds = array<i64: 4, 1>}]} {
    %cst = arith.constant 0.000000e+00 : f32
    %0 = vector.broadcast %cst : f32 to vector<4x16xf32>
    %c0 = arith.constant 0 : index
    %c0_0 = arith.constant 0 : index
    %c0_1 = arith.constant 0 : index
    %1 = vector.load %arg1[%c0, %c0_0, %c0_1] : memref<2x4x16xf32, #tpu.memory_space<vmem>>, vector<1x4x16xf32>
    %2 = vector.shape_cast %1 : vector<1x4x16xf32> to vector<4x16xf32>
    %3 = arith.addf %0, %2 : vector<4x16xf32>
    %4 = arith.mulf %2, %2 : vector<4x16xf32>
    %5 = arith.addf %0, %4 : vector<4x16xf32>
    %c1 = arith.constant 1 : index
    %c0_2 = arith.constant 0 : index
    %c0_3 = arith.constant 0 : index
    %6 = vector.load %arg1[%c1, %c0_2, %c0_3] : memref<2x4x16xf32, #tpu.memory_space<vmem>>, vector<1x4x16xf32>
    %7 = vector.shape_cast %6 : vector<1x4x16xf32> to vector<4x16xf32>
    %8 = arith.addf %3, %7 : vector<4x16xf32>
    %9 = arith.mulf %7, %7 : vector<4x16xf32>
    %10 = arith.addf %5, %9 : vector<4x16xf32>
    %cst_4 = arith.constant dense<0.000000e+00> : vector<4xf32>
    %11 = vector.multi_reduction <add>, %8, %cst_4 [1] : vector<4x16xf32> to vector<4xf32>
    %12 = vector.shape_cast %11 : vector<4xf32> to vector<4x1xf32>
    %cst_5 = arith.constant 3.125000e-02 : f32
    %13 = vector.broadcast %cst_5 : f32 to vector<4x1xf32>
    %14 = arith.mulf %12, %13 : vector<4x1xf32>
    %cst_6 = arith.constant dense<0.000000e+00> : vector<4xf32>
    %15 = vector.multi_reduction <add>, %10, %cst_6 [1] : vector<4x16xf32> to vector<4xf32>
    %16 = vector.shape_cast %15 : vector<4xf32> to vector<4x1xf32>
    %cst_7 = arith.constant 3.125000e-02 : f32
    %17 = vector.broadcast %cst_7 : f32 to vector<4x1xf32>
    %18 = arith.mulf %16, %17 : vector<4x1xf32>
    %cst_8 = arith.constant 9.99999974E-6 : f32
    %19 = vector.broadcast %cst_8 : f32 to vector<4x1xf32>
    %20 = arith.addf %19, %18 : vector<4x1xf32>
    %21 = arith.mulf %14, %14 : vector<4x1xf32>
    %22 = arith.subf %20, %21 : vector<4x1xf32>
    %23 = math.rsqrt %22 : vector<4x1xf32>
    %c0_9 = arith.constant 0 : index
    %c0_10 = arith.constant 0 : index
    %24 = vector.load %arg2[%c0_9, %c0_10] : memref<4x1xf32, #tpu.memory_space<vmem>>, vector<4x1xf32>
    %25 = arith.mulf %24, %23 : vector<4x1xf32>
    %c0_11 = arith.constant 0 : index
    %c0_12 = arith.constant 0 : index
    %26 = vector.load %arg3[%c0_11, %c0_12] : memref<4x1xf32, #tpu.memory_space<vmem>>, vector<4x1xf32>
    %27 = arith.mulf %14, %25 : vector<4x1xf32>
    %28 = arith.subf %26, %27 : vector<4x1xf32>
    %c0_13 = arith.constant 0 : index
    %c0_14 = arith.constant 0 : index
    %29 = vector.load %arg5[%c0_13, %c0_14] : memref<4x1xf32, #tpu.memory_space<vmem>>, vector<4x1xf32>
    tpu.vector_store %arg5[%c0_13, %c0_14], %14 {strides = array<i32>} : memref<4x1xf32, #tpu.memory_space<vmem>>, vector<4x1xf32>,
    %c0_15 = arith.constant 0 : index
    %c0_16 = arith.constant 0 : index
    %30 = vector.load %arg6[%c0_15, %c0_16] : memref<4x1xf32, #tpu.memory_space<vmem>>, vector<4x1xf32>
    tpu.vector_store %arg6[%c0_15, %c0_16], %18 {strides = array<i32>} : memref<4x1xf32, #tpu.memory_space<vmem>>, vector<4x1xf32>,
    %c0_17 = arith.constant 0 : index
    %c0_18 = arith.constant 0 : index
    %c0_19 = arith.constant 0 : index
    %31 = vector.load %arg1[%c0_17, %c0_18, %c0_19] : memref<2x4x16xf32, #tpu.memory_space<vmem>>, vector<1x4x16xf32>
    %32 = vector.shape_cast %31 : vector<1x4x16xf32> to vector<4x16xf32>
    %33 = vector.broadcast %25 : vector<4x1xf32> to vector<4x16xf32>
    %34 = arith.mulf %32, %33 : vector<4x16xf32>
    %35 = vector.broadcast %28 : vector<4x1xf32> to vector<4x16xf32>
    %36 = arith.addf %34, %35 : vector<4x16xf32>
    %c0_20 = arith.constant 0 : index
    %c0_21 = arith.constant 0 : index
    %c0_22 = arith.constant 0 : index
    %37 = vector.load %arg4[%c0_20, %c0_21, %c0_22] : memref<2x4x16xf32, #tpu.memory_space<vmem>>, vector<1x4x16xf32>
    %38 = vector.shape_cast %37 : vector<1x4x16xf32> to vector<4x16xf32>
    %39 = vector.shape_cast %36 : vector<4x16xf32> to vector<1x4x16xf32>
    tpu.vector_store %arg4[%c0_20, %c0_21, %c0_22], %39 {strides = array<i32>} : memref<2x4x16xf32, #tpu.memory_space<vmem>>, vector<1x4x16xf32>,
    %c1_23 = arith.constant 1 : index
    %c0_24 = arith.constant 0 : index
    %c0_25 = arith.constant 0 : index
    %40 = vector.load %arg1[%c1_23, %c0_24, %c0_25] : memref<2x4x16xf32, #tpu.memory_space<vmem>>, vector<1x4x16xf32>
    %41 = vector.shape_cast %40 : vector<1x4x16xf32> to vector<4x16xf32>
    %42 = vector.broadcast %25 : vector<4x1xf32> to vector<4x16xf32>
    %43 = arith.mulf %41, %42 : vector<4x16xf32>
    %44 = vector.broadcast %28 : vector<4x1xf32> to vector<4x16xf32>
    %45 = arith.addf %43, %44 : vector<4x16xf32>
    %c1_26 = arith.constant 1 : index
    %c0_27 = arith.constant 0 : index
    %c0_28 = arith.constant 0 : index
    %46 = vector.load %arg4[%c1_26, %c0_27, %c0_28] : memref<2x4x16xf32, #tpu.memory_space<vmem>>, vector<1x4x16xf32>
    %47 = vector.shape_cast %46 : vector<1x4x16xf32> to vector<4x16xf32>
    %48 = vector.shape_cast %45 : vector<4x16xf32> to vector<1x4x16xf32>
    tpu.vector_store %arg4[%c1_26, %c0_27, %c0_28], %48 {strides = array<i32>} : memref<2x4x16xf32, #tpu.memory_space<vmem>>, vector<1x4x16xf32>,
    return
  }
  func.func @transform_0(%arg0: i32) -> (i32, i32, i32) {
    %c0_i32 = arith.constant 0 : i32
    %c0_i32_0 = arith.constant 0 : i32
    %c0_i32_1 = arith.constant 0 : i32
    return %c0_i32, %arg0, %c0_i32_0 : i32, i32, i32
  }
  func.func @transform_1(%arg0: i32) -> (i32, i32) {
    %c0_i32 = arith.constant 0 : i32
    %c0_i32_0 = arith.constant 0 : i32
    return %arg0, %c0_i32 : i32, i32
  }
  func.func @transform_2(%arg0: i32) -> (i32, i32) {
    %c0_i32 = arith.constant 0 : i32
    %c0_i32_0 = arith.constant 0 : i32
    return %arg0, %c0_i32 : i32, i32
  }
  func.func @transform_3(%arg0: i32) -> (i32, i32, i32) {
    %c0_i32 = arith.constant 0 : i32
    %c0_i32_0 = arith.constant 0 : i32
    %c0_i32_1 = arith.constant 0 : i32
    return %c0_i32, %arg0, %c0_i32_0 : i32, i32, i32
  }
  func.func @transform_4(%arg0: i32) -> (i32, i32) {
    %c0_i32 = arith.constant 0 : i32
    %c0_i32_0 = arith.constant 0 : i32
    return %arg0, %c0_i32 : i32, i32
  }
  func.func @transform_5(%arg0: i32) -> (i32, i32) {
    %c0_i32 = arith.constant 0 : i32
    %c0_i32_0 = arith.constant 0 : i32
    return %arg0, %c0_i32 : i32, i32
  }
}

</mosaic_0001>

<llo_original>
// kernel: tpu_custom_call.1
$region0: #{tpu_custom_call.1}
  #allocation0 [shape = 'u32[]', space=smem, size = 0x4, offset = 0x4, fixed_abs, tag = 'smem constant byte address 0x4 - core index']
  #allocation1 [shape = 'u32[144,128]{1,0:T(1,128)}', space=vmem, size = 0x12000, scoped, tag = 'internal scratch']
  %s0 = inlined_call_operand.vmem [shape: f32[2,4,16], index: 0, kind: input, shape index: {}]
  %s1 = inlined_call_operand.vmem [shape: f32[4,1], index: 1, kind: input, shape index: {}]
  %s2 = inlined_call_operand.vmem [shape: f32[4,1], index: 2, kind: input, shape index: {}]
  %s3 = inlined_call_operand.hbm [shape: f32[2,4,16], index: 3, kind: output, shape index: {0}]
  %s4 = inlined_call_operand.vmem [shape: f32[4,1], index: 4, kind: output, shape index: {1}]
  %s5 = inlined_call_operand.vmem [shape: f32[4,1], index: 5, kind: output, shape index: {2}]
  %6 = xla_tuple %s3, %s4, %s5
  %s7 = sld [smem:[#allocation0]]
  $region38: #{tpu_custom_call.1} parent=0
    _
  %s9 = ssub.s32 1, %s7
  %s10 = scalar_select 0, %s9, %s7
  $region1: #{tpu_custom_call.1} parent=0
    #allocation2 [shape = 'u8[4096]{0}', space=vmem, size = 0x1000, scoped, tag = 'output window, operand 0, single buffered']
    #allocation3 [shape = 's32[1]{0}', space=sflag, size = 0x4, scoped, tag = 'scoped memory for tpu_custom_call.1']
    %11 = vsyncpa [#allocation3], 0
    // Predicated region
    $region2: #{tpu_custom_call.1} parent=1 // pred_check
      _
    $region3: #{tpu_custom_call.1} parent=1 // pred_check_branch
      %13 = sbr.rel (0) target = $region5
    $region4: #{tpu_custom_call.1} parent=1 // pred_region
      _
    $region5: #{tpu_custom_call.1} parent=1 // pred_fallthru
      _
    // Predicated region
    $region6: #{tpu_custom_call.1} parent=1 // pred_check
      _
    $region7: #{tpu_custom_call.1} parent=1 // pred_check_branch
      %15 = sbr.rel (0) target = $region9
    $region8: #{tpu_custom_call.1} parent=1 // pred_region
      _
    $region9: #{tpu_custom_call.1} parent=1 // pred_fallthru
      _
    // Predicated region
    $region10: #{tpu_custom_call.1} parent=1 // pred_check
      _
    $region11: #{tpu_custom_call.1} parent=1 // pred_check_branch
      %17 = sbr.rel (0) target = $region13
    $region12: #{tpu_custom_call.1} parent=1 // pred_region
      _
    $region13: #{tpu_custom_call.1} parent=1 // pred_fallthru
      _
    %v18 = vld [vmem:[%s0] sm:$0xf]
    %v19 = vadd.f32 %v18, 0.0
    %v20 = vmul.f32 %v18, %v18
    %v21 = vadd.f32 %v20, 0.0
    %s22 = scalar_lea.vmem %s0, 4
    %v23 = vld [vmem:[%s22] sm:$0xf]
    %v24 = vadd.f32 %v19, %v23
    %v25 = vmul.f32 %v23, %v23
    %v26 = vadd.f32 %v21, %v25
    %vm27 = vcmask 125952
    %v28 = vsel %vm27, %v24, 0.0
    %29 = vadd.xlane.f32.xlu0 %v28
    %v30 = vpop.xlane.xlu0 %29
    %v31 = vmul.f32 %v30, 0.03125
    %v32 = vsel %vm27, %v26, 0.0
    %33 = vadd.xlane.f32.xlu0 %v32
    %v34 = vpop.xlane.xlu0 %33
    %v35 = vmul.f32 %v34, 0.03125
    %v36 = vadd.f32 %v35, 1e-05
    %v37 = vmul.f32 %v31, %v31
    %v38 = vsub.f32 %v36, %v37
    %v39 = vrsqrt.pop %v38
    %v40 = vld [vmem:[%s1] sm:$0xf]
    %v41 = vmul.f32 %v40, %v39
    %v42 = vld [vmem:[%s2] sm:$0xf]
    %v43 = vmul.f32 %v31, %v41
    %v44 = vsub.f32 %v42, %v43
    %vm45 = vcmask 3072
    %46 = vst.msk [vmem:[%s4] sm:$0xf] %vm45, %v31
    %47 = vst.msk [vmem:[%s5] sm:$0xf] %vm45, %v35
    %v48 = vld [vmem:[%s0] sm:$0xf]
    %50 = vset.pattern.permute.xlu0 0
    %51 = vperm.xlu0 %50, %v41
    %v52 = vpop.permute.xlu0 %51
    %v54 = vmul.f32 %v48, %v52
    %56 = vset.pattern.permute.xlu0 0
    %57 = vperm.xlu0 %56, %v44
    %v58 = vpop.permute.xlu0 %57
    %v60 = vadd.f32 %v54, %v58
    %61 = vst.msk [vmem:[#allocation2] sm:$0xf] %vm27, %v60
    %v62 = vld [vmem:[%s22] sm:$0xf]
    %v63 = vmul.f32 %v62, %v52
    %v64 = vadd.f32 %v63, %v58
    %s65 = scalar_lea.vmem [#allocation2], 4
    %66 = vst.msk [vmem:[%s65] sm:$0xf] %vm27, %v64
    // Predicated region
    $region14: #{tpu_custom_call.1} parent=1 // pred_check
      _
    $region15: #{tpu_custom_call.1} parent=1 // pred_check_branch
      %68 = sbr.rel (0) target = $region17
    $region16: #{tpu_custom_call.1} parent=1 // pred_region
      %s70 = ssub.s32 128, 128
      %71 = vsyncadd [#allocation3], %s70
      %s72 = sshll.u32 [#allocation2], 4
      %s73 = int_to_ptr.vmem [resolvable:$true] %s72
      %78 = dma.vmem_to_hbm [thread:$0]  %s73, 128, %s3, [#allocation3], 64, 64, 4
    $region17: #{tpu_custom_call.1} parent=1 // pred_fallthru
      _
    // Predicated region
    $region18: #{tpu_custom_call.1} parent=1 // pred_check
      _
    $region19: #{tpu_custom_call.1} parent=1 // pred_check_branch
      %80 = sbr.rel (0) target = $region21
    $region20: #{tpu_custom_call.1} parent=1 // pred_region
      _
    $region21: #{tpu_custom_call.1} parent=1 // pred_fallthru
      _
    // Predicated region
    $region22: #{tpu_custom_call.1} parent=1 // pred_check
      _
    $region23: #{tpu_custom_call.1} parent=1 // pred_check_branch
      %82 = sbr.rel (0) target = $region25
    $region24: #{tpu_custom_call.1} parent=1 // pred_region
      _
    $region25: #{tpu_custom_call.1} parent=1 // pred_fallthru
      _
    // Predicated region
    $region26: #{tpu_custom_call.1} parent=1 // pred_check
      _
    $region27: #{tpu_custom_call.1} parent=1 // pred_check_branch
      %84 = sbr.rel (0) target = $region29
    $region28: #{tpu_custom_call.1} parent=1 // pred_region
      %85 = dma.done [#allocation3], 128
    $region29: #{tpu_custom_call.1} parent=1 // pred_fallthru
      _
    // Predicated region
    $region30: #{tpu_custom_call.1} parent=1 // pred_check
      _
    $region31: #{tpu_custom_call.1} parent=1 // pred_check_branch
      %87 = sbr.rel (0) target = $region33
    $region32: #{tpu_custom_call.1} parent=1 // pred_region
      _
    $region33: #{tpu_custom_call.1} parent=1 // pred_fallthru
      _
    // Predicated region
    $region34: #{tpu_custom_call.1} parent=1 // pred_check
      _
    $region35: #{tpu_custom_call.1} parent=1 // pred_check_branch
      %89 = sbr.rel (0) target = $region37
    $region36: #{tpu_custom_call.1} parent=1 // pred_region
      _
    $region37: #{tpu_custom_call.1} parent=1 // pred_fallthru
      _
    %90 = vsyncpa [#allocation3], 1

</llo_original>
